<compile_context>
chip_gen: v6e
topology: v6e:2x2x1
jax: 0.10.0
libtpu: 0.0.40
codegen_flags: <defaults>
</compile_context>

<pallas_src>
import jax
import jax.numpy as jnp
from jax import lax
from jax.experimental import pallas as pl
from jax.experimental.pallas import tpu as pltpu


# --------------------------------------------------------------------------
# VMEM budget / tiling helpers
# --------------------------------------------------------------------------
def _vmem_capacity_bytes():
    try:
        return int(pltpu.get_tpu_info().vmem_capacity_bytes)
    except Exception:
        return 64 * 1024 * 1024          # conservative fallback (v7x physical)


_VMEM_CAP = _vmem_capacity_bytes()
_WS_BUDGET = max(8 << 20, int(_VMEM_CAP * 0.45))      # working-set target/call
_VMEM_LIMIT = min(int(_VMEM_CAP * 0.85), 100 << 20)   # requested scoped VMEM
_MAX_BLOCK_BYTES = 8 << 20                            # per pipelined buffer


def _largest_aligned_divisor(n, cap, aligns=(128, 8, 1)):
    """Largest divisor d of n with d <= cap, preferring d % align == 0."""
    n = int(n)
    cap = int(max(1, min(n, cap)))
    divs, i = set(), 1
    while i * i <= n:
        if n % i == 0:
            divs.add(i)
            divs.add(n // i)
        i += 1
    divs = sorted(divs, reverse=True)
    for align in aligns:
        for d in divs:
            if d <= cap and d % align == 0:
                return d
    return 1


def _pick_k_tile(hw, ws_bytes_per_k, buf_bytes_per_k, fixed_bytes):
    """Contraction (H*W) tile sized against the VMEM working-set budget."""
    cap_budget = (_WS_BUDGET - fixed_bytes) // max(1, ws_bytes_per_k)
    cap_block = _MAX_BLOCK_BYTES // max(1, buf_bytes_per_k)
    cap = max(128, min(cap_budget, cap_block))
    # TODO(synk): for prime-ish H*W this degrades to a tiny divisor; a padded
    # / masked last block would keep tiles near-optimal for awkward shapes.
    return _largest_aligned_divisor(hw, cap, aligns=(128, 8, 1))


def _pick_c_tile(C, hw, itemsize):
    """Channel tile for the TV kernel (block = (1, tc, H*W))."""
    buf_bytes_per_c = hw * itemsize
    cap_budget = _WS_BUDGET // max(1, 2 * buf_bytes_per_c)
    cap_block = _MAX_BLOCK_BYTES // max(1, buf_bytes_per_c)
    cap = max(1, min(cap_budget, cap_block))
    sub = {4: 8, 2: 16, 1: 32}.get(int(itemsize), 8)   # packed-sublane alignment
    return _largest_aligned_divisor(C, cap, aligns=(sub, 1))


# --------------------------------------------------------------------------
# Gram matrix over a whole batch: (B, C, H, W) -> (B, C, C) / (C*H*W)
# K-tiled MXU accumulation, transpose-free dot_general.
# --------------------------------------------------------------------------
def gram_matrix(x):
    B, C, H, W = x.shape
    hw = H * W
    itemsize = jnp.dtype(x.dtype).itemsize
    xr = x.reshape(B, C, hw)                 # free row-major view
    scale = 1.0 / float(C * hw)

    fixed = 3 * C * C * 4                    # acc scratch + dbl-buffered output
    tk = _pick_k_tile(hw, 2 * C * itemsize, C * itemsize, fixed)
    nk = hw // tk

    def kernel(x_ref, g_ref, acc_ref):
        k = pl.program_id(1)

        @pl.when(k == 0)
        def _():
            acc_ref[...] = jnp.zeros_like(acc_ref)

        d = x_ref[0]                         # (C, tk), native dtype
        acc_ref[...] += lax.dot_general(
            d, d, dimension_numbers=(((1,), (1,)), ((), ())),
            preferred_element_type=jnp.float32)

        @pl.when(k == nk - 1)
        def _():
            g_ref[0] = acc_ref[...] * scale

    return pl.pallas_call(
        kernel,
        out_shape=jax.ShapeDtypeStruct((B, C, C), jnp.float32),
        grid=(B, nk),
        in_specs=[pl.BlockSpec((1, C, tk), lambda b, k: (b, 0, k))],
        out_specs=pl.BlockSpec((1, C, C), lambda b, k: (b, 0, 0)),
        scratch_shapes=[pltpu.VMEM((C, C), jnp.float32)],
        compiler_params=pltpu.CompilerParams(
            dimension_semantics=("parallel", "arbitrary"),
            vmem_limit_bytes=_VMEM_LIMIT),
    )(xr)


# --------------------------------------------------------------------------
# Fused content + style loss.
# Per O image n: gram(O[n]) is built on the MXU across K tiles while the
# content SSD vs I[n // style_size] is accumulated from the same O tile, so
# O is read from HBM exactly once for both losses and per-image grams never
# touch HBM.  Per-n partials (lane-padded) enable megacore sharding on v7x.
# --------------------------------------------------------------------------
def content_and_style_loss(O, I, gram_S, style_size):
    B_O, C, H, W = O.shape
    B_I = I.shape[0]
    B_S = gram_S.shape[0]
    hw = H * W
    chw = C * hw
    io = jnp.dtype(O.dtype).itemsize
    ii = jnp.dtype(I.dtype).itemsize

    O2 = O.reshape(B_O, C, hw)
    I2 = I.reshape(B_I, C, hw)
    gram_scale = 1.0 / float(C * hw)

    fixed = C * C * 4 + 2 * B_S * C * C * 4 + 4 * 128 * 4
    tk = _pick_k_tile(hw, 2 * C * (io + ii), C * max(io, ii), fixed)
    nk = hw // tk

    def kernel(o_ref, i_ref, gs_ref, part_ref, acc_ref, cacc_ref):
        n = pl.program_id(0)
        k = pl.program_id(1)

        @pl.when(k == 0)
        def _():
            acc_ref[...] = jnp.zeros_like(acc_ref)
            cacc_ref[0] = jnp.float32(0.0)
            part_ref[...] = jnp.zeros_like(part_ref)

        o = o_ref[0]                                   # (C, tk), native dtype
        # gram accumulation on the MXU (f32 accumulate), transpose-free
        acc_ref[...] += lax.dot_general(
            o, o, dimension_numbers=(((1,), (1,)), ((), ())),
            preferred_element_type=jnp.float32)
        # content SSD for this K tile (same O tile, streamed I tile)
        d = o.astype(jnp.float32) - i_ref[0].astype(jnp.float32)
        cacc_ref[0] += jnp.sum(d * d)

        @pl.when(k == nk - 1)
        def _():
            g = acc_ref[...] * gram_scale
            gd = g - gs_ref[n % style_size]            # gram_S resident in VMEM
            style_ssd = jnp.sum(gd * gd)
            lane = lax.broadcasted_iota(jnp.int32, (1, 128), 1)
            part_ref[0] = jnp.where(
                lane == 0, cacc_ref[0],
                jnp.where(lane == 1, style_ssd, jnp.float32(0.0)))

    partials = pl.pallas_call(
        kernel,
        out_shape=jax.ShapeDtypeStruct((B_O, 1, 128), jnp.float32),
        grid=(B_O, nk),
        in_specs=[
            pl.BlockSpec((1, C, tk), lambda n, k: (n, 0, k)),
            pl.BlockSpec((1, C, tk), lambda n, k: (n // style_size, 0, k)),
            # full (B_S, C, C) gram(S) fetched once, kept resident in VMEM
            pl.BlockSpec((B_S, C, C), lambda n, k: (0, 0, 0)),
        ],
        out_specs=pl.BlockSpec((1, 1, 128), lambda n, k: (n, 0, 0)),
        scratch_shapes=[pltpu.VMEM((C, C), jnp.float32),
                        pltpu.SMEM((1,), jnp.float32)],
        compiler_params=pltpu.CompilerParams(
            dimension_semantics=("parallel", "arbitrary"),
            vmem_limit_bytes=_VMEM_LIMIT),
    )(O2, I2, gram_S)

    content_loss = jnp.sum(partials[:, 0, 0]) / jnp.float32(chw)
    style_loss = jnp.sum(partials[:, 0, 1]) / jnp.float32(style_size * C * C)
    return content_loss, style_loss


# --------------------------------------------------------------------------
# Total-variation loss: one lane-dense pass over O (viewed as (B, C, H*W)).
# Height diffs (p, p+W) are always in-bounds for p < H*W - W (no mask);
# width diffs (p, p+1) are masked out at row ends.  Per-b partials -> megacore.
# --------------------------------------------------------------------------
def tv_loss(data_in):
    B, C, H, W = data_in.shape
    hw = H * W
    itemsize = jnp.dtype(data_in.dtype).itemsize
    x3 = data_in.reshape(B, C, hw)           # free view, H*W on the lane axis

    tc = _pick_c_tile(C, hw, itemsize)
    n_c = C // tc

    def kernel(x_ref, out_ref):
        c = pl.program_id(1)

        @pl.when(c == 0)
        def _():
            out_ref[...] = jnp.zeros_like(out_ref)

        x = x_ref[0].astype(jnp.float32)      # (tc, hw), lane-dense
        if H > 1:
            dh = x[:, W:] - x[:, : hw - W]    # every pair valid, no mask
            s_h = jnp.sum(dh * dh)
        else:
            s_h = jnp.float32(0.0)
        if W > 1:
            dwf = x[:, 1:] - x[:, : hw - 1]
            pos = lax.broadcasted_iota(jnp.int32, dwf.shape, 1)
            dw = jnp.where(pos % W != (W - 1), dwf, jnp.float32(0.0))
            s_w = jnp.sum(dw * dw)
        else:
            s_w = jnp.float32(0.0)
        lane = lax.broadcasted_iota(jnp.int32, (1, 128), 1)
        out_ref[0] += jnp.where(lane == 0, s_h,
                                jnp.where(lane == 1, s_w, jnp.float32(0.0)))

    sums = pl.pallas_call(
        kernel,
        out_shape=jax.ShapeDtypeStruct((B, 1, 128), jnp.float32),
        grid=(B, n_c),
        in_specs=[pl.BlockSpec((1, tc, hw), lambda b, c: (b, c, 0))],
        out_specs=pl.BlockSpec((1, 1, 128), lambda b, c: (b, 0, 0)),
        compiler_params=pltpu.CompilerParams(
            dimension_semantics=("parallel", "arbitrary"),
            vmem_limit_bytes=_VMEM_LIMIT),
    )(x3)

    height_size = C * (H - 1) * W
    width_size = C * H * (W - 1)
    sum_h = jnp.sum(sums[:, 0, 0])
    sum_w = jnp.sum(sums[:, 0, 1])
    # NOTE: the double division (MSE already divides by the element count,
    # then we divide by height_size/width_size again) faithfully reproduces
    # the PyTorch reference's tv_loss formula -- do not "fix".
    tv_height = sum_h / jnp.float32(B * height_size)
    tv_width = sum_w / jnp.float32(B * width_size)
    return (tv_height / height_size + tv_width / width_size) / B


# --------------------------------------------------------------------------
# StyleBnakLoss.forward
# --------------------------------------------------------------------------
def style_bnak_loss(O, I, S):
    """O: (len(I)*len(S), C, H, W), I: (B_I, C, H, W), S: (B_S, C, H, W)."""
    B_I = I.shape[0]
    style_size = S.shape[0]
    assert O.shape[0] == B_I * style_size
    assert O.shape[1:] == I.shape[1:]
    assert O.shape[1] == S.shape[1]

    # content / style feature extractors are identity (see note at top)
    gram_S = gram_matrix(S)
    content_loss, style_loss = content_and_style_loss(O, I, gram_S, style_size)
    total_variation_loss = tv_loss(O)
    return content_loss, style_loss, total_variation_loss


# --------------------------------------------------------------------------
# pure-jnp reference (sanity check only)
# --------------------------------------------------------------------------
def _ref_losses(O, I, S):
    def _mse(a, b):
        return jnp.mean((a - b) ** 2)

    def _gram(x):
        B, C, H, W = x.shape
        d = x.reshape(B, C, H * W)
        return jnp.einsum("bij,bkj->bik", d, d) / (C * H * W)

    B_I, style_size = I.shape[0], S.shape[0]
    c = sum(_mse(O[j * style_size + i], I[j])
            for j in range(B_I) for i in range(style_size))
    s = sum(_mse(_gram(O[j * style_size:(j + 1) * style_size]), _gram(S))
            for j in range(B_I))
    B, C, H, W = O.shape
    tv_h = _mse(O[:, :, 1:, :], O[:, :, :-1, :])
    tv_w = _mse(O[:, :, :, 1:], O[:, :, :, :-1])
    tv = (tv_h / (C * (H - 1) * W) + tv_w / (C * H * (W - 1))) / B
    return c, s, tv


if __name__ == "__main__":
    key = jax.random.PRNGKey(0)
    k1, k2, k3 = jax.random.split(key, 3)

    B_I, B_S, C, H, W = 2, 2, 4, 16, 16      # small shapes
    I = jax.random.normal(k1, (B_I, C, H, W), jnp.float32)
    S = jax.random.normal(k2, (B_S, C, H, W), jnp.float32)
    O = jax.random.normal(k3, (B_I * B_S, C, H, W), jnp.float32)

    content_l, style_l, tv_l = style_bnak_loss(O, I, S)
    jax.block_until_ready((content_l, style_l, tv_l))

    rc, rs, rtv = _ref_losses(O, I, S)
    assert jnp.allclose(content_l, rc, rtol=1e-4, atol=1e-6), (content_l, rc)
    assert jnp.allclose(style_l, rs, rtol=1e-4, atol=1e-6), (style_l, rs)
    assert jnp.allclose(tv_l, rtv, rtol=1e-4, atol=1e-8), (tv_l, rtv)

    print("KERNEL_OK")
</pallas_src>

<mosaic_0001>
module attributes {stable_mosaic.version = 11 : i64} {
  func.func @kernel(%arg0: i32, %arg1: i32, %arg2: memref<1x4x256xf32, #tpu.memory_space<vmem>>, %arg3: memref<1x4x4xf32, #tpu.memory_space<vmem>>, %arg4: memref<4x4xf32, #tpu.memory_space<vmem>>) attributes {dimension_semantics = [#tpu.dimension_semantics<parallel>, #tpu.dimension_semantics<arbitrary>], iteration_bounds = array<i64: 2, 1>, scalar_prefetch = 0 : i64, scratch_operands = 1 : i64, tpu.core_type = #tpu.core_type<tc>, window_params = [{transform_indices = @transform_0, window_bounds = array<i64: 1, 4, 256>}, {transform_indices = @transform_1, window_bounds = array<i64: 1, 4, 4>}]} {
    %c0_i32 = arith.constant 0 : i32
    %0 = arith.cmpi eq, %arg1, %c0_i32 : i32
    %1 = arith.extui %0 : i1 to i32
    %c0_i32_0 = arith.constant 0 : i32
    %2 = arith.cmpi ne, %1, %c0_i32_0 : i32
    scf.if %2 {
      %cst_9 = arith.constant 0.000000e+00 : f32
      %12 = vector.broadcast %cst_9 : f32 to vector<4x4xf32>
      %c0_10 = arith.constant 0 : index
      %c0_11 = arith.constant 0 : index
      %13 = vector.load %arg4[%c0_10, %c0_11] : memref<4x4xf32, #tpu.memory_space<vmem>>, vector<4x4xf32>
      tpu.vector_store %arg4[%c0_10, %c0_11], %12 {strides = array<i32>} : memref<4x4xf32, #tpu.memory_space<vmem>>, vector<4x4xf32>,
    } else {
    }
    %c0 = arith.constant 0 : index
    %c0_1 = arith.constant 0 : index
    %c0_2 = arith.constant 0 : index
    %3 = vector.load %arg2[%c0, %c0_1, %c0_2] : memref<1x4x256xf32, #tpu.memory_space<vmem>>, vector<1x4x256xf32>
    %4 = vector.shape_cast %3 : vector<1x4x256xf32> to vector<4x256xf32>
    %c0_3 = arith.constant 0 : index
    %c0_4 = arith.constant 0 : index
    %5 = vector.load %arg4[%c0_3, %c0_4] : memref<4x4xf32, #tpu.memory_space<vmem>>, vector<4x4xf32>
    %cst = arith.constant dense<0.000000e+00> : vector<4x4xf32>
    %6 = tpu.matmul %4, %4, %cst {dimension_numbers = #tpu.dot_dimension_numbers<[1], [1], [0], [0], [0, 0, 1, 0], [], []>} : vector<4x256xf32>, vector<4x256xf32>, vector<4x4xf32> -> vector<4x4xf32>
    %7 = arith.addf %5, %6 : vector<4x4xf32>
    %c0_5 = arith.constant 0 : index
    %c0_6 = arith.constant 0 : index
    %8 = vector.load %arg4[%c0_5, %c0_6] : memref<4x4xf32, #tpu.memory_space<vmem>>, vector<4x4xf32>
    tpu.vector_store %arg4[%c0_5, %c0_6], %7 {strides = array<i32>} : memref<4x4xf32, #tpu.memory_space<vmem>>, vector<4x4xf32>,
    %c0_i32_7 = arith.constant 0 : i32
    %9 = arith.cmpi eq, %arg1, %c0_i32_7 : i32
    %10 = arith.extui %9 : i1 to i32
    %c0_i32_8 = arith.constant 0 : i32
    %11 = arith.cmpi ne, %10, %c0_i32_8 : i32
    scf.if %11 {
      %c0_9 = arith.constant 0 : index
      %c0_10 = arith.constant 0 : index
      %12 = vector.load %arg4[%c0_9, %c0_10] : memref<4x4xf32, #tpu.memory_space<vmem>>, vector<4x4xf32>
      %cst_11 = arith.constant 9.765625E-4 : f32
      %13 = vector.broadcast %cst_11 : f32 to vector<4x4xf32>
      %14 = arith.mulf %12, %13 : vector<4x4xf32>
      %c0_12 = arith.constant 0 : index
      %c0_13 = arith.constant 0 : index
      %c0_14 = arith.constant 0 : index
      %15 = vector.load %arg3[%c0_12, %c0_13, %c0_14] : memref<1x4x4xf32, #tpu.memory_space<vmem>>, vector<1x4x4xf32>
      %16 = vector.shape_cast %15 : vector<1x4x4xf32> to vector<4x4xf32>
      %17 = vector.shape_cast %14 : vector<4x4xf32> to vector<1x4x4xf32>
      tpu.vector_store %arg3[%c0_12, %c0_13, %c0_14], %17 {strides = array<i32>} : memref<1x4x4xf32, #tpu.memory_space<vmem>>, vector<1x4x4xf32>,
    } else {
    }
    return
  }
  func.func @transform_0(%arg0: i32, %arg1: i32) -> (i32, i32, i32) {
    %c0_i32 = arith.constant 0 : i32
    %c0_i32_0 = arith.constant 0 : i32
    return %arg0, %c0_i32, %arg1 : i32, i32, i32
  }
  func.func @transform_1(%arg0: i32, %arg1: i32) -> (i32, i32, i32) {
    %c0_i32 = arith.constant 0 : i32
    %c0_i32_0 = arith.constant 0 : i32
    %c0_i32_1 = arith.constant 0 : i32
    return %arg0, %c0_i32, %c0_i32_0 : i32, i32, i32
  }
}

</mosaic_0001>

<llo_original>
// kernel: tpu_custom_call.1
$region0: #{tpu_custom_call.1}
  #allocation0 [shape = 'u32[]', space=smem, size = 0x4, offset = 0x4, fixed_abs, tag = 'smem constant byte address 0x4 - core index']
  #allocation1 [shape = 'u32[144,128]{1,0:T(1,128)}', space=vmem, size = 0x12000, scoped, tag = 'internal scratch']
  #allocation2 [shape = 'f32[4,4]{1,0:T(4,128)}', space=vmem, size = 0x800, scoped, tag = 'scratch operand']
  %s0 = inlined_call_operand.hbm [shape: f32[2,4,256], index: 0, kind: input, shape index: {}]
  %s1 = inlined_call_operand.hbm [shape: f32[2,4,4], index: 1, kind: output, shape index: {}]
  %s2 = sld [smem:[#allocation0]]
  $region49: #{tpu_custom_call.1} parent=0
    _
  %s4 = ssub.s32 1, %s2
  %s5 = scalar_select 0, %s4, %s2
  $region1: #{tpu_custom_call.1} parent=0
    #allocation3 [shape = 'u8[8192]{0}', space=vmem, size = 0x2000, scoped, tag = 'input window, operand 0']
    #allocation4 [shape = 's32[2]{0}', space=sflag, size = 0x8, scoped, tag = 'scoped memory for tpu_custom_call.1']
    #allocation5 [shape = 's32[2]{0}', space=sflag, size = 0x8, scoped, tag = 'scoped memory for tpu_custom_call.1']
    #allocation6 [shape = 'u8[4096]{0}', space=vmem, size = 0x1000, scoped, tag = 'output window, operand 0']
    %6 = vsyncpa [#allocation4], 0
    %s7 = scalar_lea.sflag [#allocation4], 1
    %8 = vsyncpa %s7, 0
    %9 = vsyncpa [#allocation5], 0
    %s10 = scalar_lea.sflag [#allocation5], 1
    %11 = vsyncpa %s10, 0
    loop: start=0, step=1, limit=4
    $region2: #{tpu_custom_call.1} parent=1 // loop_pre_header
      _
    $region3: #{tpu_custom_call.1} parent=1 // loop_header
      %s13 = sphi 0, %s17
      %p14 = scmp.ge.s32.totalorder %s13, 4
      %s20 = sphi 0, %s32
      %s21 = sphi 0, %s28
      %s22 = sphi 0, %s20
      %s23 = sphi 0, %s21
      %s24 = sphi 0, %s22
      %s25 = sphi 0, %s23
      %s37 = sphi 0, %s39
      %s40 = sphi 0, %s37
      %s41 = sphi 0, %s40
      %s57 = sphi 0, %s41
      %s63 = sphi 0, %s65
      %s66 = sphi 0, %s63
      %s67 = sphi 0, %s66
      %s83 = sphi 0, %s67
    $region4: #{tpu_custom_call.1} parent=1 // loop_header_branch
      %16 = sbr.rel (%p14) target = $region8
    $region5: #{tpu_custom_call.1} parent=1 // loop_body
      %s18 = ssub.s32 %s13, 1
      %s19 = ssub.s32 %s13, 2
      %s26 = sadd.s32 1, %s21
      %p27 = scmp.ge.s32.totalorder %s26, 1
      %s28 = scalar_select %p27, 0, %s26
      %s29 = sadd.s32 1, %s20
      %s30 = scalar_select %p27, %s29, %s20
      %p31 = scmp.ge.s32.totalorder %s30, 2
      %s32 = scalar_select %p31, 0, %s30
      %s33 = ssub.s32 %s20, %s32
      %s34 = ssub.s32 %s21, %s28
      %s35 = sor.u32 %s33, %s34
      %p36 = scmp.eq.s32.totalorder %s35, 0
      %s38 = sadd.s32 %s37, 1
      %s39 = scalar_select %p36, %s37, %s38
      %p42 = pneg %p36
      %p43 = scmp.eq.s32.totalorder %s13, 1
      %p44 = por %p42, %p43
      %p45 = scmp.ne.s32.totalorder %s37, %s40
      %p46 = scmp.eq.s32.totalorder %s13, 0
      %p47 = por %p45, %p46
      %p48 = scmp.ne.s32.totalorder %s37, %s40
      %p49 = scmp.eq.s32.totalorder %s18, 1
      %p50 = por %p48, %p49
      %p51 = scmp.ne.s32.totalorder %s40, %s41
      %p52 = scmp.eq.s32.totalorder %s18, 0
      %p53 = por %p51, %p52
      %p54 = scmp.ne.s32.totalorder %s40, %s41
      %p55 = scmp.eq.s32.totalorder %s19, 1
      %p56 = por %p54, %p55
      %p58 = scmp.ne.s32.totalorder %s41, %s57
      %p59 = scmp.eq.s32.totalorder %s19, 0
      %p60 = por %p58, %p59
      %s61 = ssub.s32 %s20, %s32
      %p62 = scmp.eq.s32.totalorder %s61, 0
      %s64 = sadd.s32 %s63, 1
      %s65 = scalar_select %p62, %s63, %s64
      %p68 = pneg %p62
      %p69 = scmp.eq.s32.totalorder %s13, 1
      %p70 = por %p68, %p69
      %p71 = scmp.ne.s32.totalorder %s63, %s66
      %p72 = scmp.eq.s32.totalorder %s13, 0
      %p73 = por %p71, %p72
      %p74 = scmp.ne.s32.totalorder %s63, %s66
      %p75 = scmp.eq.s32.totalorder %s18, 1
      %p76 = por %p74, %p75
      %p77 = scmp.ne.s32.totalorder %s66, %s67
      %p78 = scmp.eq.s32.totalorder %s18, 0
      %p79 = por %p77, %p78
      %p80 = scmp.ne.s32.totalorder %s66, %s67
      %p81 = scmp.eq.s32.totalorder %s19, 1
      %p82 = por %p80, %p81
      %p84 = scmp.ne.s32.totalorder %s67, %s83
      %p85 = scmp.eq.s32.totalorder %s19, 0
      %p86 = por %p84, %p85
      %p87 = scmp.le.s32.totalorder 1, %s13
      %p88 = scmp.lt.s32.totalorder %s13, 3
      %p89 = pnand %p87, %p88
      %p90 = pneg %p89
      // Predicated region
      $region9: #{tpu_custom_call.1} parent=5 // pred_check
        _
      $region10: #{tpu_custom_call.1} parent=5 // pred_check_branch
        %92 = sbr.rel (%p89) target = $region12
      $region11: #{tpu_custom_call.1} parent=5 // pred_region
        %s93 = ssub.s32 %s13, 1
      $region12: #{tpu_custom_call.1} parent=5 // pred_fallthru
        _
      %p94 = scmp.lt.s32.totalorder %s13, 2
      // Predicated region
      $region13: #{tpu_custom_call.1} parent=5 // pred_check
        %p95 = pneg %p94
      $region14: #{tpu_custom_call.1} parent=5 // pred_check_branch
        %97 = sbr.rel (%p95) target = $region16
      $region15: #{tpu_custom_call.1} parent=5 // pred_region
        // Predicated region
        $region17: #{tpu_custom_call.1} parent=15 // pred_check
          %p98 = pneg %p47
        $region18: #{tpu_custom_call.1} parent=15 // pred_check_branch
          %100 = sbr.rel (%p98) target = $region20
        $region19: #{tpu_custom_call.1} parent=15 // pred_region
          %s101 = sand.u32 %s37, 1
          %s102 = scalar_lea.sflag [#allocation4], %s101
          %s103 = sand.u32 %s37, 1
          %s104 = smul.addr %s103, 8
          %s105 = scalar_lea.vmem [#allocation3], %s104
          %s106 = smul.u32 2, %s21
          %s108 = ssub.s32 128, 128
          %109 = vsyncadd %s102, %s108
          %s110 = smul.addr %s20, 2
          %s111 = sadd.s32 %s106, %s110
          %s112 = smul.addr %s111, 64
          %s113 = scalar_lea.hbm %s0, %s112
          %s115 = sshll.u32 %s105, 4
          %s116 = int_to_ptr.vmem [resolvable:$true] %s115
          %118 = dma.hbm_to_vmem [thread:$0]  %s113, 128, %s116, %s102
        $region20: #{tpu_custom_call.1} parent=15 // pred_fallthru
          _
      $region16: #{tpu_custom_call.1} parent=5 // pred_fallthru
        _
      %p119 = scmp.le.s32.totalorder 1, %s13
      %p120 = scmp.lt.s32.totalorder %s13, 3
      %p121 = pnand %p119, %p120
      %p122 = pneg %p121
      // Predicated region
      $region21: #{tpu_custom_call.1} parent=5 // pred_check
        _
      $region22: #{tpu_custom_call.1} parent=5 // pred_check_branch
        %124 = sbr.rel (%p121) target = $region24
      $region23: #{tpu_custom_call.1} parent=5 // pred_region
        %s125 = ssub.s32 %s13, 1
        %s126 = sand.u32 %s40, 1
        %s127 = scalar_lea.sflag [#allocation4], %s126
        %s128 = sand.u32 %s40, 1
        %s129 = smul.addr %s128, 8
        %s130 = scalar_lea.vmem [#allocation3], %s129
        // Predicated region
        $region25: #{tpu_custom_call.1} parent=23 // pred_check
          %p131 = pneg %p53
        $region26: #{tpu_custom_call.1} parent=23 // pred_check_branch
          %133 = sbr.rel (%p131) target = $region28
        $region27: #{tpu_custom_call.1} parent=23 // pred_region
          %134 = dma.done %s127, 128
        $region28: #{tpu_custom_call.1} parent=23 // pred_fallthru
          _
        %s135 = sand.u32 %s40, 1
        %s136 = scalar_lea.sflag [#allocation4], %s135
        %s137 = sand.u32 %s40, 1
        %s138 = smul.addr %s137, 8
        %s139 = scalar_lea.vmem [#allocation3], %s138
        %p140 = pneg %p53
        %p141 = pneg %p50
        %p142 = pneg %p79
        %p143 = pneg %p76
        %s144 = sand.u32 %s66, 1
        %s145 = scalar_lea.sflag [#allocation5], %s144
        %s146 = sand.u32 %s66, 1
        %s147 = smul.addr %s146, 4
        %s148 = scalar_lea.vmem [#allocation6], %s147
        %s149 = smul.u32 2, %s23
        %p150 = scmp.eq.s32.totalorder %s23, 0
        // Predicated region
        $region29: #{tpu_custom_call.1} parent=23 // pred_check
          %p151 = pneg %p150
        $region30: #{tpu_custom_call.1} parent=23 // pred_check_branch
          %153 = sbr.rel (%p151) target = $region32
        $region31: #{tpu_custom_call.1} parent=23 // pred_region
          %vm154 = vcmask 27648
          %155 = vst.msk [vmem:[#allocation2] sm:$0xf] %vm154, 0.0
        $region32: #{tpu_custom_call.1} parent=23 // pred_fallthru
          _
        %v156 = vld [vmem:[%s130] sm:$0xff]
        %v157 = vld [vmem:[#allocation2] sm:$0xf]
        %v159 = vcombine.high %v156, %v156
        %161 = vmatprep.subr.mxu0 0.0
        %162 = vmatpush1.xpose.msra.mxu0 0.0
        %163 = vmatprep.subr.mxu0 0.0
        %164 = vmatpush1.xpose.msra.mxu0 0.0
        %165 = vmatprep.subr.mxu0 0.0
        %166 = vmatpush1.xpose.msra.mxu0 0.0
        %167 = vmatprep.subr.mxu0 0.0
        %168 = vmatpush1.xpose.msra.mxu0 0.0
        %169 = vmatprep.subr.mxu0 0.0
        %170 = vmatpush1.xpose.msra.mxu0 0.0
        %171 = vmatprep.subr.mxu0 0.0
        %172 = vmatpush1.xpose.msra.mxu0 0.0
        %173 = vmatprep.subr.mxu0 0.0
        %174 = vmatpush1.xpose.msra.mxu0 0.0
        %175 = vmatprep.subr.mxu0 0.0
        %176 = vmatpush1.xpose.msra.mxu0 0.0
        %177 = vmatprep.subr.mxu0 0.0
        %178 = vmatpush1.xpose.msra.mxu0 0.0
        %179 = vmatprep.subr.mxu0 0.0
        %180 = vmatpush1.xpose.msra.mxu0 0.0
        %181 = vmatprep.subr.mxu0 0.0
        %182 = vmatpush1.xpose.msra.mxu0 0.0
        %183 = vmatprep.subr.mxu0 0.0
        %184 = vmatpush1.xpose.msra.mxu0 0.0
        %185 = vmatprep.subr.mxu0 0.0
        %186 = vmatpush1.xpose.msra.mxu0 0.0
        %187 = vmatprep.subr.mxu0 0.0
        %188 = vmatpush1.xpose.msra.mxu0 0.0
        %189 = vmatprep.subr.mxu0 0.0
        %190 = vmatpush1.xpose.msra.mxu0 0.0
        %191 = vmatprep.subr.mxu0 %v159
        %192 = vmatpush1.xpose.msra.mxu0 %v156
        %193 = vmatprep.subr.mxu0 0.0
        %194 = vmatpush2.xpose.msra.mxu0 0.0
        %195 = vmatprep.subr.mxu0 0.0
        %196 = vmatpush2.xpose.msra.mxu0 0.0
        %197 = vmatprep.subr.mxu0 0.0
        %198 = vmatpush2.xpose.msra.mxu0 0.0
        %199 = vmatprep.subr.mxu0 0.0
        %200 = vmatpush2.xpose.msra.mxu0 0.0
        %201 = vmatprep.subr.mxu0 0.0
        %202 = vmatpush2.xpose.msra.mxu0 0.0
        %203 = vmatprep.subr.mxu0 0.0
        %204 = vmatpush2.xpose.msra.mxu0 0.0
        %205 = vmatprep.subr.mxu0 0.0
        %206 = vmatpush2.xpose.msra.mxu0 0.0
        %207 = vmatprep.subr.mxu0 0.0
        %208 = vmatpush2.xpose.msra.mxu0 0.0
        %209 = vmatprep.subr.mxu0 0.0
        %210 = vmatpush2.xpose.msra.mxu0 0.0
        %211 = vmatprep.subr.mxu0 0.0
        %212 = vmatpush2.xpose.msra.mxu0 0.0
        %213 = vmatprep.subr.mxu0 0.0
        %214 = vmatpush2.xpose.msra.mxu0 0.0
        %215 = vmatprep.subr.mxu0 0.0
        %216 = vmatpush2.xpose.msra.mxu0 0.0
        %217 = vmatprep.subr.mxu0 0.0
        %218 = vmatpush2.xpose.msra.mxu0 0.0
        %219 = vmatprep.subr.mxu0 0.0
        %220 = vmatpush2.xpose.msra.mxu0 0.0
        %221 = vmatprep.subr.mxu0 0.0
        %222 = vmatpush2.xpose.msra.mxu0 0.0
        %223 = vmatprep.subr.mxu0 0.0
        %224 = vmatpush2.xpose.msra.mxu0 0.0
        %225 = vmatprep.mubr.f32.mxu0 %v159
        %226 = vmatmul.mubr.f32.gmra.mxu0 %v156
        %v227 = vpop.f32.mrf.mxu0
        %v228 = vadd.f32 0.0, %v227
        %v229 = vpop.f32.mrf.mxu0
        %230 = vdwg.mxu0
        %v231 = vadd.f32 %v157, %v228
        %vm232 = vcmask 27648
        %233 = vst.msk [vmem:[#allocation2] sm:$0xf] %vm232, %v231
        // Predicated region
        $region33: #{tpu_custom_call.1} parent=23 // pred_check
          %p234 = pneg %p150
        $region34: #{tpu_custom_call.1} parent=23 // pred_check_branch
          %236 = sbr.rel (%p234) target = $region36
        $region35: #{tpu_custom_call.1} parent=23 // pred_region
          %v237 = vld [vmem:[#allocation2] sm:$0xf]
          %v238 = vmul.f32 %v237, 0.0009765625
          %239 = vst.msk [vmem:[%s148] sm:$0xf] %vm232, %v238
        $region36: #{tpu_custom_call.1} parent=23 // pred_fallthru
          _
        %s240 = sand.u32 %s66, 1
        %s241 = scalar_lea.sflag [#allocation5], %s240
        %s242 = sand.u32 %s66, 1
        %s243 = smul.addr %s242, 4
        %s244 = scalar_lea.vmem [#allocation6], %s243
        // Predicated region
        $region37: #{tpu_custom_call.1} parent=23 // pred_check
          %p245 = pneg %p76
        $region38: #{tpu_custom_call.1} parent=23 // pred_check_branch
          %247 = sbr.rel (%p245) target = $region40
        $region39: #{tpu_custom_call.1} parent=23 // pred_region
          %s249 = ssub.s32 64, 64
          %250 = vsyncadd %s241, %s249
          %s251 = smul.addr %s22, 64
          %s252 = scalar_lea.hbm %s1, %s251
          %s254 = sshll.u32 %s244, 4
          %s255 = int_to_ptr.vmem [resolvable:$true] %s254
          %257 = dma.vmem_to_hbm [thread:$0]  %s255, 64, %s252, %s241
        $region40: #{tpu_custom_call.1} parent=23 // pred_fallthru
          _
      $region24: #{tpu_custom_call.1} parent=5 // pred_fallthru
        _
      %p258 = scmp.le.s32.totalorder 2, %s13
      // Predicated region
      $region41: #{tpu_custom_call.1} parent=5 // pred_check
        %p259 = pneg %p258
      $region42: #{tpu_custom_call.1} parent=5 // pred_check_branch
        %261 = sbr.rel (%p259) target = $region44
      $region43: #{tpu_custom_call.1} parent=5 // pred_region
        %s262 = ssub.s32 %s13, 2
        // Predicated region
        $region45: #{tpu_custom_call.1} parent=43 // pred_check
          %p263 = pneg %p82
        $region46: #{tpu_custom_call.1} parent=43 // pred_check_branch
          %265 = sbr.rel (%p263) target = $region48
        $region47: #{tpu_custom_call.1} parent=43 // pred_region
          %s266 = sand.u32 %s67, 1
          %s267 = scalar_lea.sflag [#allocation5], %s266
          %s268 = sand.u32 %s67, 1
          %s269 = smul.addr %s268, 4
          %s270 = scalar_lea.vmem [#allocation6], %s269
          %271 = dma.done %s267, 64
        $region48: #{tpu_custom_call.1} parent=43 // pred_fallthru
          _
      $region44: #{tpu_custom_call.1} parent=5 // pred_fallthru
        _
    $region6: #{tpu_custom_call.1} parent=1 // loop_footer
      %s17 = sadd.s32 1, %s13
    $region7: #{tpu_custom_call.1} parent=1 // loop_footer_branch
      %12 = sbr.rel target = $region3
    $region8: #{tpu_custom_call.1} parent=1 // loop_exit
      _
    %272 = vsyncpa [#allocation4], 1
    %s273 = scalar_lea.sflag [#allocation4], 1
    %274 = vsyncpa %s273, 1
    %275 = vsyncpa [#allocation5], 1
    %s276 = scalar_lea.sflag [#allocation5], 1
    %277 = vsyncpa %s276, 1

</llo_original>
